<compile_context>
chip_gen: v7x
topology: tpu7x:2x2x1
jax: 0.10.0
libtpu: 0.0.40
codegen_flags: <defaults>
</compile_context>

<pallas_src>
import jax
import jax.numpy as jnp
from jax import lax
from jax.experimental import pallas as pl
from jax.experimental.pallas import tpu as pltpu


# -----------------------------------------------------------------------------
# Kernel 1: per-image 1x1 convs (bias-free) + per-channel sum / sum-of-squares
# partials used to build the BatchNorm batch statistics.
# -----------------------------------------------------------------------------
def stats_kernel(gate_ref, skip_ref, wg_ref, wx_ref,
                 sg_ref, ssg_ref, sx_ref, ssx_ref):
    g1 = jnp.dot(wg_ref[...], gate_ref[0],
                 preferred_element_type=jnp.float32)          # (ncoef, HW)
    x1 = jnp.dot(wx_ref[...], skip_ref[0],
                 preferred_element_type=jnp.float32)          # (ncoef, HW)
    sg_ref[0] = jnp.sum(g1, axis=1, keepdims=True)            # (ncoef, 1)
    ssg_ref[0] = jnp.sum(g1 * g1, axis=1, keepdims=True)
    sx_ref[0] = jnp.sum(x1, axis=1, keepdims=True)
    ssx_ref[0] = jnp.sum(x1 * x1, axis=1, keepdims=True)


# -----------------------------------------------------------------------------
# Kernel 2: fully fused attention gate.
# BN is pre-folded into the conv weights (wg_s, wx_s) and a combined shift.
# -----------------------------------------------------------------------------
def attention_kernel(gate_ref, skip_ref, wg_ref, wx_ref, shift_ref,
                     wpsi_ref, bpsi_ref, out_ref):
    g = gate_ref[0]                                           # (F_g, HW)
    s = skip_ref[0]                                           # (F_l, HW)
    pre = (jnp.dot(wg_ref[...], g, preferred_element_type=jnp.float32)
           + jnp.dot(wx_ref[...], s, preferred_element_type=jnp.float32)
           + shift_ref[...])                                  # (ncoef, HW)
    pre = jnp.maximum(pre, 0.0)                               # ReLU
    # psi 1x1 conv (n_coef -> 1): broadcast-FMA + sublane reduction (VPU/XLU,
    # avoids an M=1 MXU push), then sigmoid.
    logits = jnp.sum(wpsi_ref[...] * pre, axis=0, keepdims=True) + bpsi_ref[0]
    psi = 1.0 / (1.0 + jnp.exp(-logits))                      # (1, HW)
    out_ref[0] = (s * psi).astype(out_ref.dtype)              # gate the skip


# -----------------------------------------------------------------------------
# Wrapper implementing AttentionBlock.forward (training-mode BatchNorm stats).
# -----------------------------------------------------------------------------
def attention_block_forward(gate, skip, wg, bg, gamma_g, beta_g,
                            wx, bx, gamma_x, beta_x, wpsi, bpsi, eps=1e-5):
    """gate: (N, F_g, H, W), skip: (N, F_l, H, W).  Returns (N, F_l, H, W)."""
    del bg, bx  # per-channel conv biases cancel exactly in training-mode BN
    N, Fg, H, W = gate.shape
    _, Fl, _, _ = skip.shape
    ncoef = wg.shape[0]
    HW = H * W

    # Free contiguous reshapes (NCHW kept, H*W becomes the lane axis).
    gate2 = gate.reshape(N, Fg, HW)
    skip2 = skip.reshape(N, Fl, HW)

    # --- Pass 1: per-image partial BN statistics ----------------------------
    stat_shape = jax.ShapeDtypeStruct((N, ncoef, 1), jnp.float32)
    stat_spec = pl.BlockSpec((1, ncoef, 1), lambda n: (n, 0, 0))
    sg, ssg, sx, ssx = pl.pallas_call(
        stats_kernel,
        out_shape=(stat_shape, stat_shape, stat_shape, stat_shape),
        grid_spec=pltpu.PrefetchScalarGridSpec(
            num_scalar_prefetch=0,
            grid=(N,),
            in_specs=[
                pl.BlockSpec((1, Fg, HW), lambda n: (n, 0, 0)),
                pl.BlockSpec((1, Fl, HW), lambda n: (n, 0, 0)),
                pl.BlockSpec((ncoef, Fg), lambda n: (0, 0)),
                pl.BlockSpec((ncoef, Fl), lambda n: (0, 0)),
            ],
            out_specs=[stat_spec, stat_spec, stat_spec, stat_spec],
        ),
        compiler_params=pltpu.CompilerParams(
            dimension_semantics=("parallel",)),
    )(gate2, skip2, wg, wx)

    # --- Tiny glue: reduce partials, fold BN into weights/shift --------------
    cnt = jnp.float32(N * HW)
    mean_g = jnp.sum(sg[:, :, 0], axis=0) / cnt               # (ncoef,)
    mean_x = jnp.sum(sx[:, :, 0], axis=0) / cnt
    # TODO(synk): E[x^2]-E[x]^2 in f32 can lose precision for large-mean
    # activations at scale; switch to a shifted / two-pass variance if needed.
    var_g = jnp.sum(ssg[:, :, 0], axis=0) / cnt - mean_g * mean_g
    var_x = jnp.sum(ssx[:, :, 0], axis=0) / cnt - mean_x * mean_x

    scale_g = gamma_g * lax.rsqrt(var_g + eps)
    scale_x = gamma_x * lax.rsqrt(var_x + eps)
    shift = (beta_g - mean_g * scale_g) + (beta_x - mean_x * scale_x)
    wg_s = wg * scale_g[:, None]                              # (ncoef, Fg)
    wx_s = wx * scale_x[:, None]                              # (ncoef, Fl)

    # --- Pass 2: fused conv + BN + add + ReLU + psi-conv + sigmoid + gate ----
    out2 = pl.pallas_call(
        attention_kernel,
        out_shape=jax.ShapeDtypeStruct((N, Fl, HW), jnp.float32),
        grid_spec=pltpu.PrefetchScalarGridSpec(
            num_scalar_prefetch=0,
            grid=(N,),
            in_specs=[
                pl.BlockSpec((1, Fg, HW), lambda n: (n, 0, 0)),
                pl.BlockSpec((1, Fl, HW), lambda n: (n, 0, 0)),
                pl.BlockSpec((ncoef, Fg), lambda n: (0, 0)),
                pl.BlockSpec((ncoef, Fl), lambda n: (0, 0)),
                pl.BlockSpec((ncoef, 1), lambda n: (0, 0)),
                pl.BlockSpec((ncoef, 1), lambda n: (0, 0)),
                pl.BlockSpec(memory_space=pltpu.MemorySpace.SMEM),  # bpsi scalar
            ],
            out_specs=pl.BlockSpec((1, Fl, HW), lambda n: (n, 0, 0)),
        ),
        compiler_params=pltpu.CompilerParams(
            dimension_semantics=("parallel",)),
    )(gate2, skip2, wg_s, wx_s,
      shift.reshape(ncoef, 1), wpsi.reshape(ncoef, 1), bpsi.reshape(1))

    return out2.reshape(N, Fl, H, W)


# -----------------------------------------------------------------------------
# Pure-JAX reference (same math as the PyTorch module in training mode).
# -----------------------------------------------------------------------------
def attention_block_reference(gate, skip, wg, bg, gamma_g, beta_g,
                              wx, bx, gamma_x, beta_x, wpsi, bpsi, eps=1e-5):
    def conv1x1(x, w, b):
        return jnp.einsum('oc,nchw->nohw', w, x) + b.reshape(1, -1, 1, 1)

    def batchnorm(y, gamma, beta):
        mean = jnp.mean(y, axis=(0, 2, 3), keepdims=True)
        var = jnp.mean((y - mean) ** 2, axis=(0, 2, 3), keepdims=True)
        y = (y - mean) * lax.rsqrt(var + eps)
        return y * gamma.reshape(1, -1, 1, 1) + beta.reshape(1, -1, 1, 1)

    g1 = batchnorm(conv1x1(gate, wg, bg), gamma_g, beta_g)
    x1 = batchnorm(conv1x1(skip, wx, bx), gamma_x, beta_x)
    pre = jnp.maximum(g1 + x1, 0.0)
    logits = jnp.einsum('c,nchw->nhw', wpsi, pre)[:, None] + bpsi.reshape(1, 1, 1, 1)
    psi = jax.nn.sigmoid(logits)
    return skip * psi


if __name__ == "__main__":
    key = jax.random.PRNGKey(0)
    ks = jax.random.split(key, 12)

    # AttentionBlock(F_g=8, F_l=8, n_coefficients=4), batch=2, spatial 16x16
    N, Fg, Fl, ncoef, H, W = 2, 8, 8, 4, 16, 16   # HW = 256 -> lane-dense

    gate = jax.random.normal(ks[0], (N, Fg, H, W), jnp.float32)
    skip = jax.random.normal(ks[1], (N, Fl, H, W), jnp.float32)
    wg = jax.random.normal(ks[2], (ncoef, Fg), jnp.float32) * 0.1
    bg = jax.random.normal(ks[3], (ncoef,), jnp.float32) * 0.1
    wx = jax.random.normal(ks[4], (ncoef, Fl), jnp.float32) * 0.1
    bx = jax.random.normal(ks[5], (ncoef,), jnp.float32) * 0.1
    gamma_g = 1.0 + 0.1 * jax.random.normal(ks[6], (ncoef,), jnp.float32)
    beta_g = 0.1 * jax.random.normal(ks[7], (ncoef,), jnp.float32)
    gamma_x = 1.0 + 0.1 * jax.random.normal(ks[8], (ncoef,), jnp.float32)
    beta_x = 0.1 * jax.random.normal(ks[9], (ncoef,), jnp.float32)
    wpsi = jax.random.normal(ks[10], (ncoef,), jnp.float32) * 0.1
    bpsi = jax.random.normal(ks[11], (1,), jnp.float32) * 0.1

    out = jax.block_until_ready(attention_block_forward(
        gate, skip, wg, bg, gamma_g, beta_g, wx, bx, gamma_x, beta_x,
        wpsi, bpsi))
    ref = jax.block_until_ready(attention_block_reference(
        gate, skip, wg, bg, gamma_g, beta_g, wx, bx, gamma_x, beta_x,
        wpsi, bpsi))

    assert out.shape == (N, Fl, H, W), out.shape
    err = float(jnp.max(jnp.abs(out - ref)))
    assert err < 1e-3, err
    print("KERNEL_OK")
</pallas_src>

<mosaic_0001>
module attributes {stable_mosaic.version = 11 : i64} {
  func.func @stats_kernel(%arg0: i32, %arg1: memref<1x8x256xf32, #tpu.memory_space<vmem>>, %arg2: memref<1x8x256xf32, #tpu.memory_space<vmem>>, %arg3: memref<4x8xf32, #tpu.memory_space<vmem>>, %arg4: memref<4x8xf32, #tpu.memory_space<vmem>>, %arg5: memref<1x4x1xf32, #tpu.memory_space<vmem>>, %arg6: memref<1x4x1xf32, #tpu.memory_space<vmem>>, %arg7: memref<1x4x1xf32, #tpu.memory_space<vmem>>, %arg8: memref<1x4x1xf32, #tpu.memory_space<vmem>>) attributes {dimension_semantics = [#tpu.dimension_semantics<parallel>], iteration_bounds = array<i64: 2>, scalar_prefetch = 0 : i64, scratch_operands = 0 : i64, tpu.core_type = #tpu.core_type<tc>, window_params = [{transform_indices = @transform_0, window_bounds = array<i64: 1, 8, 256>}, {transform_indices = @transform_1, window_bounds = array<i64: 1, 8, 256>}, {pipeline_mode = #tpu.pipeline_mode<synchronous>, transform_indices = @transform_2, window_bounds = array<i64: 4, 8>}, {pipeline_mode = #tpu.pipeline_mode<synchronous>, transform_indices = @transform_3, window_bounds = array<i64: 4, 8>}, {transform_indices = @transform_4, window_bounds = array<i64: 1, 4, 1>}, {transform_indices = @transform_5, window_bounds = array<i64: 1, 4, 1>}, {transform_indices = @transform_6, window_bounds = array<i64: 1, 4, 1>}, {transform_indices = @transform_7, window_bounds = array<i64: 1, 4, 1>}]} {
    %c0 = arith.constant 0 : index
    %c0_0 = arith.constant 0 : index
    %0 = vector.load %arg3[%c0, %c0_0] : memref<4x8xf32, #tpu.memory_space<vmem>>, vector<4x8xf32>
    %c0_1 = arith.constant 0 : index
    %c0_2 = arith.constant 0 : index
    %c0_3 = arith.constant 0 : index
    %1 = vector.load %arg1[%c0_1, %c0_2, %c0_3] : memref<1x8x256xf32, #tpu.memory_space<vmem>>, vector<1x8x256xf32>
    %2 = vector.shape_cast %1 : vector<1x8x256xf32> to vector<8x256xf32>
    %cst = arith.constant dense<0.000000e+00> : vector<4x256xf32>
    %3 = tpu.matmul %0, %2, %cst {dimension_numbers = #tpu.dot_dimension_numbers<[1], [0], [0], [1], [0, 0, 1, 1], [], []>} : vector<4x8xf32>, vector<8x256xf32>, vector<4x256xf32> -> vector<4x256xf32>
    %c0_4 = arith.constant 0 : index
    %c0_5 = arith.constant 0 : index
    %4 = vector.load %arg4[%c0_4, %c0_5] : memref<4x8xf32, #tpu.memory_space<vmem>>, vector<4x8xf32>
    %c0_6 = arith.constant 0 : index
    %c0_7 = arith.constant 0 : index
    %c0_8 = arith.constant 0 : index
    %5 = vector.load %arg2[%c0_6, %c0_7, %c0_8] : memref<1x8x256xf32, #tpu.memory_space<vmem>>, vector<1x8x256xf32>
    %6 = vector.shape_cast %5 : vector<1x8x256xf32> to vector<8x256xf32>
    %cst_9 = arith.constant dense<0.000000e+00> : vector<4x256xf32>
    %7 = tpu.matmul %4, %6, %cst_9 {dimension_numbers = #tpu.dot_dimension_numbers<[1], [0], [0], [1], [0, 0, 1, 1], [], []>} : vector<4x8xf32>, vector<8x256xf32>, vector<4x256xf32> -> vector<4x256xf32>
    %cst_10 = arith.constant dense<0.000000e+00> : vector<4xf32>
    %8 = vector.multi_reduction <add>, %3, %cst_10 [1] : vector<4x256xf32> to vector<4xf32>
    %9 = vector.shape_cast %8 : vector<4xf32> to vector<4x1xf32>
    %c0_11 = arith.constant 0 : index
    %c0_12 = arith.constant 0 : index
    %c0_13 = arith.constant 0 : index
    %10 = vector.load %arg5[%c0_11, %c0_12, %c0_13] : memref<1x4x1xf32, #tpu.memory_space<vmem>>, vector<1x4x1xf32>
    %11 = vector.shape_cast %10 : vector<1x4x1xf32> to vector<4x1xf32>
    %12 = vector.shape_cast %9 : vector<4x1xf32> to vector<1x4x1xf32>
    tpu.vector_store %arg5[%c0_11, %c0_12, %c0_13], %12 {strides = array<i32>} : memref<1x4x1xf32, #tpu.memory_space<vmem>>, vector<1x4x1xf32>,
    %13 = arith.mulf %3, %3 : vector<4x256xf32>
    %cst_14 = arith.constant dense<0.000000e+00> : vector<4xf32>
    %14 = vector.multi_reduction <add>, %13, %cst_14 [1] : vector<4x256xf32> to vector<4xf32>
    %15 = vector.shape_cast %14 : vector<4xf32> to vector<4x1xf32>
    %c0_15 = arith.constant 0 : index
    %c0_16 = arith.constant 0 : index
    %c0_17 = arith.constant 0 : index
    %16 = vector.load %arg6[%c0_15, %c0_16, %c0_17] : memref<1x4x1xf32, #tpu.memory_space<vmem>>, vector<1x4x1xf32>
    %17 = vector.shape_cast %16 : vector<1x4x1xf32> to vector<4x1xf32>
    %18 = vector.shape_cast %15 : vector<4x1xf32> to vector<1x4x1xf32>
    tpu.vector_store %arg6[%c0_15, %c0_16, %c0_17], %18 {strides = array<i32>} : memref<1x4x1xf32, #tpu.memory_space<vmem>>, vector<1x4x1xf32>,
    %cst_18 = arith.constant dense<0.000000e+00> : vector<4xf32>
    %19 = vector.multi_reduction <add>, %7, %cst_18 [1] : vector<4x256xf32> to vector<4xf32>
    %20 = vector.shape_cast %19 : vector<4xf32> to vector<4x1xf32>
    %c0_19 = arith.constant 0 : index
    %c0_20 = arith.constant 0 : index
    %c0_21 = arith.constant 0 : index
    %21 = vector.load %arg7[%c0_19, %c0_20, %c0_21] : memref<1x4x1xf32, #tpu.memory_space<vmem>>, vector<1x4x1xf32>
    %22 = vector.shape_cast %21 : vector<1x4x1xf32> to vector<4x1xf32>
    %23 = vector.shape_cast %20 : vector<4x1xf32> to vector<1x4x1xf32>
    tpu.vector_store %arg7[%c0_19, %c0_20, %c0_21], %23 {strides = array<i32>} : memref<1x4x1xf32, #tpu.memory_space<vmem>>, vector<1x4x1xf32>,
    %24 = arith.mulf %7, %7 : vector<4x256xf32>
    %cst_22 = arith.constant dense<0.000000e+00> : vector<4xf32>
    %25 = vector.multi_reduction <add>, %24, %cst_22 [1] : vector<4x256xf32> to vector<4xf32>
    %26 = vector.shape_cast %25 : vector<4xf32> to vector<4x1xf32>
    %c0_23 = arith.constant 0 : index
    %c0_24 = arith.constant 0 : index
    %c0_25 = arith.constant 0 : index
    %27 = vector.load %arg8[%c0_23, %c0_24, %c0_25] : memref<1x4x1xf32, #tpu.memory_space<vmem>>, vector<1x4x1xf32>
    %28 = vector.shape_cast %27 : vector<1x4x1xf32> to vector<4x1xf32>
    %29 = vector.shape_cast %26 : vector<4x1xf32> to vector<1x4x1xf32>
    tpu.vector_store %arg8[%c0_23, %c0_24, %c0_25], %29 {strides = array<i32>} : memref<1x4x1xf32, #tpu.memory_space<vmem>>, vector<1x4x1xf32>,
    return
  }
  func.func @transform_0(%arg0: i32) -> (i32, i32, i32) {
    %c0_i32 = arith.constant 0 : i32
    %c0_i32_0 = arith.constant 0 : i32
    %c0_i32_1 = arith.constant 0 : i32
    return %arg0, %c0_i32, %c0_i32_0 : i32, i32, i32
  }
  func.func @transform_1(%arg0: i32) -> (i32, i32, i32) {
    %c0_i32 = arith.constant 0 : i32
    %c0_i32_0 = arith.constant 0 : i32
    %c0_i32_1 = arith.constant 0 : i32
    return %arg0, %c0_i32, %c0_i32_0 : i32, i32, i32
  }
  func.func @transform_2(%arg0: i32) -> (i32, i32) {
    %c0_i32 = arith.constant 0 : i32
    %c0_i32_0 = arith.constant 0 : i32
    %c0_i32_1 = arith.constant 0 : i32
    return %c0_i32, %c0_i32_0 : i32, i32
  }
  func.func @transform_3(%arg0: i32) -> (i32, i32) {
    %c0_i32 = arith.constant 0 : i32
    %c0_i32_0 = arith.constant 0 : i32
    %c0_i32_1 = arith.constant 0 : i32
    return %c0_i32, %c0_i32_0 : i32, i32
  }
  func.func @transform_4(%arg0: i32) -> (i32, i32, i32) {
    %c0_i32 = arith.constant 0 : i32
    %c0_i32_0 = arith.constant 0 : i32
    %c0_i32_1 = arith.constant 0 : i32
    return %arg0, %c0_i32, %c0_i32_0 : i32, i32, i32
  }
  func.func @transform_5(%arg0: i32) -> (i32, i32, i32) {
    %c0_i32 = arith.constant 0 : i32
    %c0_i32_0 = arith.constant 0 : i32
    %c0_i32_1 = arith.constant 0 : i32
    return %arg0, %c0_i32, %c0_i32_0 : i32, i32, i32
  }
  func.func @transform_6(%arg0: i32) -> (i32, i32, i32) {
    %c0_i32 = arith.constant 0 : i32
    %c0_i32_0 = arith.constant 0 : i32
    %c0_i32_1 = arith.constant 0 : i32
    return %arg0, %c0_i32, %c0_i32_0 : i32, i32, i32
  }
  func.func @transform_7(%arg0: i32) -> (i32, i32, i32) {
    %c0_i32 = arith.constant 0 : i32
    %c0_i32_0 = arith.constant 0 : i32
    %c0_i32_1 = arith.constant 0 : i32
    return %arg0, %c0_i32, %c0_i32_0 : i32, i32, i32
  }
}

</mosaic_0001>

<llo_original>
// kernel: tpu_custom_call.1
$region0: #{tpu_custom_call.1}
  #allocation0 [shape = 'u32[]', space=smem, size = 0x4, offset = 0x4, fixed_abs, tag = 'smem constant byte address 0x4 - core index']
  #allocation1 [shape = 'u32[144,128]{1,0:T(1,128)}', space=vmem, size = 0x12000, scoped, tag = 'internal scratch']
  %s0 = inlined_call_operand.hbm [shape: f32[2,8,256], index: 0, kind: input, shape index: {}]
  %s1 = inlined_call_operand.hbm [shape: f32[2,8,256], index: 1, kind: input, shape index: {}]
  %s2 = inlined_call_operand.vmem [shape: f32[4,8], index: 2, kind: input, shape index: {}]
  %s3 = inlined_call_operand.vmem [shape: f32[4,8], index: 3, kind: input, shape index: {}]
  %s4 = inlined_call_operand.vmem [shape: f32[2,4,1], index: 4, kind: output, shape index: {0}]
  %s5 = inlined_call_operand.vmem [shape: f32[2,4,1], index: 5, kind: output, shape index: {1}]
  %s6 = inlined_call_operand.vmem [shape: f32[2,4,1], index: 6, kind: output, shape index: {2}]
  %s7 = inlined_call_operand.vmem [shape: f32[2,4,1], index: 7, kind: output, shape index: {3}]
  %8 = xla_tuple %s4, %s5, %s6, %s7
  %s9 = sld [smem:[#allocation0]]
  $region81: #{tpu_custom_call.1} parent=0
    _
  %s11 = ssub.s32 1, %s9
  %s12 = scalar_select 0, %s11, %s9
  $region1: #{tpu_custom_call.1} parent=0
    #allocation2 [shape = 'u8[16384]{0}', space=vmem, size = 0x4000, scoped, tag = 'input window, operand 0']
    #allocation3 [shape = 's32[2]{0}', space=sflag, size = 0x8, scoped, tag = 'scoped memory for tpu_custom_call.1']
    #allocation4 [shape = 'u8[16384]{0}', space=vmem, size = 0x4000, scoped, tag = 'input window, operand 1']
    #allocation5 [shape = 's32[2]{0}', space=sflag, size = 0x8, scoped, tag = 'scoped memory for tpu_custom_call.1']
    %13 = vsyncpa [#allocation3], 0
    %s14 = scalar_lea.sflag [#allocation3], 1
    %15 = vsyncpa %s14, 0
    %16 = vsyncpa [#allocation5], 0
    %s17 = scalar_lea.sflag [#allocation5], 1
    %18 = vsyncpa %s17, 0
    loop: start=0, step=1, limit=4
    $region2: #{tpu_custom_call.1} parent=1 // loop_pre_header
      _
    $region3: #{tpu_custom_call.1} parent=1 // loop_header
      %s20 = sphi 0, %s24
      %p21 = scmp.ge.s32.totalorder %s20, 4
      %s30 = sphi 0, %s32
      %s33 = sphi 0, %s30
      %s34 = sphi 0, %s33
      %s50 = sphi 0, %s34
      %s56 = sphi 0, %s58
      %s59 = sphi 0, %s56
      %s60 = sphi 0, %s59
      %s76 = sphi 0, %s60
      %s80 = sphi 0, %s80
      %s82 = sphi 0, %s80
      %s83 = sphi 0, %s82
      %s97 = sphi 0, %s83
      %s101 = sphi 0, %s101
      %s103 = sphi 0, %s101
      %s104 = sphi 0, %s103
      %s118 = sphi 0, %s104
      %s124 = sphi 0, %s126
      %s127 = sphi 0, %s124
      %s128 = sphi 0, %s127
      %s144 = sphi 0, %s128
      %s150 = sphi 0, %s152
      %s153 = sphi 0, %s150
      %s154 = sphi 0, %s153
      %s170 = sphi 0, %s154
      %s176 = sphi 0, %s178
      %s179 = sphi 0, %s176
      %s180 = sphi 0, %s179
      %s196 = sphi 0, %s180
      %s202 = sphi 0, %s204
      %s205 = sphi 0, %s202
      %s206 = sphi 0, %s205
      %s222 = sphi 0, %s206
    $region4: #{tpu_custom_call.1} parent=1 // loop_header_branch
      %23 = sbr.rel (%p21) target = $region8
    $region5: #{tpu_custom_call.1} parent=1 // loop_body
      %s25 = ssub.s32 %s20, 1
      %s26 = ssub.s32 %s20, 2
      %s27 = sadd.s32 %s20, 1
      %s28 = ssub.s32 %s20, %s27
      %p29 = scmp.eq.s32.totalorder %s28, 0
      %s31 = sadd.s32 %s30, 1
      %s32 = scalar_select %p29, %s30, %s31
      %p35 = pneg %p29
      %p36 = scmp.eq.s32.totalorder %s20, 1
      %p37 = por %p35, %p36
      %p38 = scmp.ne.s32.totalorder %s30, %s33
      %p39 = scmp.eq.s32.totalorder %s20, 0
      %p40 = por %p38, %p39
      %p41 = scmp.ne.s32.totalorder %s30, %s33
      %p42 = scmp.eq.s32.totalorder %s25, 1
      %p43 = por %p41, %p42
      %p44 = scmp.ne.s32.totalorder %s33, %s34
      %p45 = scmp.eq.s32.totalorder %s25, 0
      %p46 = por %p44, %p45
      %p47 = scmp.ne.s32.totalorder %s33, %s34
      %p48 = scmp.eq.s32.totalorder %s26, 1
      %p49 = por %p47, %p48
      %p51 = scmp.ne.s32.totalorder %s34, %s50
      %p52 = scmp.eq.s32.totalorder %s26, 0
      %p53 = por %p51, %p52
      %s54 = ssub.s32 %s20, %s27
      %p55 = scmp.eq.s32.totalorder %s54, 0
      %s57 = sadd.s32 %s56, 1
      %s58 = scalar_select %p55, %s56, %s57
      %p61 = pneg %p55
      %p62 = scmp.eq.s32.totalorder %s20, 1
      %p63 = por %p61, %p62
      %p64 = scmp.ne.s32.totalorder %s56, %s59
      %p65 = scmp.eq.s32.totalorder %s20, 0
      %p66 = por %p64, %p65
      %p67 = scmp.ne.s32.totalorder %s56, %s59
      %p68 = scmp.eq.s32.totalorder %s25, 1
      %p69 = por %p67, %p68
      %p70 = scmp.ne.s32.totalorder %s59, %s60
      %p71 = scmp.eq.s32.totalorder %s25, 0
      %p72 = por %p70, %p71
      %p73 = scmp.ne.s32.totalorder %s59, %s60
      %p74 = scmp.eq.s32.totalorder %s26, 1
      %p75 = por %p73, %p74
      %p77 = scmp.ne.s32.totalorder %s60, %s76
      %p78 = scmp.eq.s32.totalorder %s26, 0
      %p79 = por %p77, %p78
      %s81 = sadd.s32 %s80, 1
      %p84 = scmp.eq.s32.totalorder %s20, 1
      %p85 = scmp.ne.s32.totalorder %s80, %s82
      %p86 = scmp.eq.s32.totalorder %s20, 0
      %p87 = por %p85, %p86
      %p88 = scmp.ne.s32.totalorder %s80, %s82
      %p89 = scmp.eq.s32.totalorder %s25, 1
      %p90 = por %p88, %p89
      %p91 = scmp.ne.s32.totalorder %s82, %s83
      %p92 = scmp.eq.s32.totalorder %s25, 0
      %p93 = por %p91, %p92
      %p94 = scmp.ne.s32.totalorder %s82, %s83
      %p95 = scmp.eq.s32.totalorder %s26, 1
      %p96 = por %p94, %p95
      %p98 = scmp.ne.s32.totalorder %s83, %s97
      %p99 = scmp.eq.s32.totalorder %s26, 0
      %p100 = por %p98, %p99
      %s102 = sadd.s32 %s101, 1
      %p105 = scmp.eq.s32.totalorder %s20, 1
      %p106 = scmp.ne.s32.totalorder %s101, %s103
      %p107 = scmp.eq.s32.totalorder %s20, 0
      %p108 = por %p106, %p107
      %p109 = scmp.ne.s32.totalorder %s101, %s103
      %p110 = scmp.eq.s32.totalorder %s25, 1
      %p111 = por %p109, %p110
      %p112 = scmp.ne.s32.totalorder %s103, %s104
      %p113 = scmp.eq.s32.totalorder %s25, 0
      %p114 = por %p112, %p113
      %p115 = scmp.ne.s32.totalorder %s103, %s104
      %p116 = scmp.eq.s32.totalorder %s26, 1
      %p117 = por %p115, %p116
      %p119 = scmp.ne.s32.totalorder %s104, %s118
      %p120 = scmp.eq.s32.totalorder %s26, 0
      %p121 = por %p119, %p120
      %s122 = ssub.s32 %s20, %s27
      %p123 = scmp.eq.s32.totalorder %s122, 0
      %s125 = sadd.s32 %s124, 1
      %s126 = scalar_select %p123, %s124, %s125
      %p129 = pneg %p123
      %p130 = scmp.eq.s32.totalorder %s20, 1
      %p131 = por %p129, %p130
      %p132 = scmp.ne.s32.totalorder %s124, %s127
      %p133 = scmp.eq.s32.totalorder %s20, 0
      %p134 = por %p132, %p133
      %p135 = scmp.ne.s32.totalorder %s124, %s127
      %p136 = scmp.eq.s32.totalorder %s25, 1
      %p137 = por %p135, %p136
      %p138 = scmp.ne.s32.totalorder %s127, %s128
      %p139 = scmp.eq.s32.totalorder %s25, 0
      %p140 = por %p138, %p139
      %p141 = scmp.ne.s32.totalorder %s127, %s128
      %p142 = scmp.eq.s32.totalorder %s26, 1
      %p143 = por %p141, %p142
      %p145 = scmp.ne.s32.totalorder %s128, %s144
      %p146 = scmp.eq.s32.totalorder %s26, 0
      %p147 = por %p145, %p146
      %s148 = ssub.s32 %s20, %s27
      %p149 = scmp.eq.s32.totalorder %s148, 0
      %s151 = sadd.s32 %s150, 1
      %s152 = scalar_select %p149, %s150, %s151
      %p155 = pneg %p149
      %p156 = scmp.eq.s32.totalorder %s20, 1
      %p157 = por %p155, %p156
      %p158 = scmp.ne.s32.totalorder %s150, %s153
      %p159 = scmp.eq.s32.totalorder %s20, 0
      %p160 = por %p158, %p159
      %p161 = scmp.ne.s32.totalorder %s150, %s153
      %p162 = scmp.eq.s32.totalorder %s25, 1
      %p163 = por %p161, %p162
      %p164 = scmp.ne.s32.totalorder %s153, %s154
      %p165 = scmp.eq.s32.totalorder %s25, 0
      %p166 = por %p164, %p165
      %p167 = scmp.ne.s32.totalorder %s153, %s154
      %p168 = scmp.eq.s32.totalorder %s26, 1
      %p169 = por %p167, %p168
      %p171 = scmp.ne.s32.totalorder %s154, %s170
      %p172 = scmp.eq.s32.totalorder %s26, 0
      %p173 = por %p171, %p172
      %s174 = ssub.s32 %s20, %s27
      %p175 = scmp.eq.s32.totalorder %s174, 0
      %s177 = sadd.s32 %s176, 1
      %s178 = scalar_select %p175, %s176, %s177
      %p181 = pneg %p175
      %p182 = scmp.eq.s32.totalorder %s20, 1
      %p183 = por %p181, %p182
      %p184 = scmp.ne.s32.totalorder %s176, %s179
      %p185 = scmp.eq.s32.totalorder %s20, 0
      %p186 = por %p184, %p185
      %p187 = scmp.ne.s32.totalorder %s176, %s179
      %p188 = scmp.eq.s32.totalorder %s25, 1
      %p189 = por %p187, %p188
      %p190 = scmp.ne.s32.totalorder %s179, %s180
      %p191 = scmp.eq.s32.totalorder %s25, 0
      %p192 = por %p190, %p191
      %p193 = scmp.ne.s32.totalorder %s179, %s180
      %p194 = scmp.eq.s32.totalorder %s26, 1
      %p195 = por %p193, %p194
      %p197 = scmp.ne.s32.totalorder %s180, %s196
      %p198 = scmp.eq.s32.totalorder %s26, 0
      %p199 = por %p197, %p198
      %s200 = ssub.s32 %s20, %s27
      %p201 = scmp.eq.s32.totalorder %s200, 0
      %s203 = sadd.s32 %s202, 1
      %s204 = scalar_select %p201, %s202, %s203
      %p207 = pneg %p201
      %p208 = scmp.eq.s32.totalorder %s20, 1
      %p209 = por %p207, %p208
      %p210 = scmp.ne.s32.totalorder %s202, %s205
      %p211 = scmp.eq.s32.totalorder %s20, 0
      %p212 = por %p210, %p211
      %p213 = scmp.ne.s32.totalorder %s202, %s205
      %p214 = scmp.eq.s32.totalorder %s25, 1
      %p215 = por %p213, %p214
      %p216 = scmp.ne.s32.totalorder %s205, %s206
      %p217 = scmp.eq.s32.totalorder %s25, 0
      %p218 = por %p216, %p217
      %p219 = scmp.ne.s32.totalorder %s205, %s206
      %p220 = scmp.eq.s32.totalorder %s26, 1
      %p221 = por %p219, %p220
      %p223 = scmp.ne.s32.totalorder %s206, %s222
      %p224 = scmp.eq.s32.totalorder %s26, 0
      %p225 = por %p223, %p224
      %p226 = scmp.le.s32.totalorder 1, %s20
      %p227 = scmp.lt.s32.totalorder %s20, 3
      %p228 = pnand %p226, %p227
      %p229 = pneg %p228
      // Predicated region
      $region9: #{tpu_custom_call.1} parent=5 // pred_check
        _
      $region10: #{tpu_custom_call.1} parent=5 // pred_check_branch
        %231 = sbr.rel (%p228) target = $region12
      $region11: #{tpu_custom_call.1} parent=5 // pred_region
        %s232 = ssub.s32 %s20, 1
        // Predicated region
        $region13: #{tpu_custom_call.1} parent=11 // pred_check
          %p233 = pneg %p93
        $region14: #{tpu_custom_call.1} parent=11 // pred_check_branch
          %235 = sbr.rel (%p233) target = $region16
        $region15: #{tpu_custom_call.1} parent=11 // pred_region
          _
        $region16: #{tpu_custom_call.1} parent=11 // pred_fallthru
          _
        // Predicated region
        $region17: #{tpu_custom_call.1} parent=11 // pred_check
          %p236 = pneg %p114
        $region18: #{tpu_custom_call.1} parent=11 // pred_check_branch
          %238 = sbr.rel (%p236) target = $region20
        $region19: #{tpu_custom_call.1} parent=11 // pred_region
          _
        $region20: #{tpu_custom_call.1} parent=11 // pred_fallthru
          _
      $region12: #{tpu_custom_call.1} parent=5 // pred_fallthru
        _
      %p239 = scmp.lt.s32.totalorder %s20, 2
      // Predicated region
      $region21: #{tpu_custom_call.1} parent=5 // pred_check
        %p240 = pneg %p239
      $region22: #{tpu_custom_call.1} parent=5 // pred_check_branch
        %242 = sbr.rel (%p240) target = $region24
      $region23: #{tpu_custom_call.1} parent=5 // pred_region
        // Predicated region
        $region25: #{tpu_custom_call.1} parent=23 // pred_check
          %p243 = pneg %p40
        $region26: #{tpu_custom_call.1} parent=23 // pred_check_branch
          %245 = sbr.rel (%p243) target = $region28
        $region27: #{tpu_custom_call.1} parent=23 // pred_region
          %s246 = sand.u32 %s30, 1
          %s247 = scalar_lea.sflag [#allocation3], %s246
          %s248 = sand.u32 %s30, 1
          %s249 = smul.addr %s248, 16
          %s250 = scalar_lea.vmem [#allocation2], %s249
          %s252 = ssub.s32 256, 256
          %253 = vsyncadd %s247, %s252
          %s254 = smul.addr %s20, 2
          %s255 = smul.addr %s254, 128
          %s256 = scalar_lea.hbm %s0, %s255
          %s258 = sshll.u32 %s250, 4
          %s259 = int_to_ptr.vmem [resolvable:$true] %s258
          %261 = dma.hbm_to_vmem [thread:$0]  %s256, 256, %s259, %s247
        $region28: #{tpu_custom_call.1} parent=23 // pred_fallthru
          _
        // Predicated region
        $region29: #{tpu_custom_call.1} parent=23 // pred_check
          %p262 = pneg %p66
        $region30: #{tpu_custom_call.1} parent=23 // pred_check_branch
          %264 = sbr.rel (%p262) target = $region32
        $region31: #{tpu_custom_call.1} parent=23 // pred_region
          %s265 = sand.u32 %s56, 1
          %s266 = scalar_lea.sflag [#allocation5], %s265
          %s267 = sand.u32 %s56, 1
          %s268 = smul.addr %s267, 16
          %s269 = scalar_lea.vmem [#allocation4], %s268
          %s271 = ssub.s32 256, 256
          %272 = vsyncadd %s266, %s271
          %s273 = smul.addr %s20, 2
          %s274 = smul.addr %s273, 128
          %s275 = scalar_lea.hbm %s1, %s274
          %s277 = sshll.u32 %s269, 4
          %s278 = int_to_ptr.vmem [resolvable:$true] %s277
          %280 = dma.hbm_to_vmem [thread:$0]  %s275, 256, %s278, %s266
        $region32: #{tpu_custom_call.1} parent=23 // pred_fallthru
          _
      $region24: #{tpu_custom_call.1} parent=5 // pred_fallthru
        _
      %p281 = scmp.le.s32.totalorder 1, %s20
      %p282 = scmp.lt.s32.totalorder %s20, 3
      %p283 = pnand %p281, %p282
      %p284 = pneg %p283
      // Predicated region
      $region33: #{tpu_custom_call.1} parent=5 // pred_check
        _
      $region34: #{tpu_custom_call.1} parent=5 // pred_check_branch
        %286 = sbr.rel (%p283) target = $region36
      $region35: #{tpu_custom_call.1} parent=5 // pred_region
        %s287 = ssub.s32 %s20, 1
        %s288 = sand.u32 %s33, 1
        %s289 = scalar_lea.sflag [#allocation3], %s288
        %s290 = sand.u32 %s33, 1
        %s291 = smul.addr %s290, 16
        %s292 = scalar_lea.vmem [#allocation2], %s291
        // Predicated region
        $region37: #{tpu_custom_call.1} parent=35 // pred_check
          %p293 = pneg %p46
        $region38: #{tpu_custom_call.1} parent=35 // pred_check_branch
          %295 = sbr.rel (%p293) target = $region40
        $region39: #{tpu_custom_call.1} parent=35 // pred_region
          %296 = dma.done %s289, 256
        $region40: #{tpu_custom_call.1} parent=35 // pred_fallthru
          _
        %s297 = sand.u32 %s59, 1
        %s298 = scalar_lea.sflag [#allocation5], %s297
        %s299 = sand.u32 %s59, 1
        %s300 = smul.addr %s299, 16
        %s301 = scalar_lea.vmem [#allocation4], %s300
        // Predicated region
        $region41: #{tpu_custom_call.1} parent=35 // pred_check
          %p302 = pneg %p72
        $region42: #{tpu_custom_call.1} parent=35 // pred_check_branch
          %304 = sbr.rel (%p302) target = $region44
        $region43: #{tpu_custom_call.1} parent=35 // pred_region
          %305 = dma.done %s298, 256
        $region44: #{tpu_custom_call.1} parent=35 // pred_fallthru
          _
        %s306 = sand.u32 %s33, 1
        %s307 = scalar_lea.sflag [#allocation3], %s306
        %s308 = sand.u32 %s33, 1
        %s309 = smul.addr %s308, 16
        %s310 = scalar_lea.vmem [#allocation2], %s309
        %p311 = pneg %p46
        %p312 = pneg %p43
        %s313 = sand.u32 %s59, 1
        %s314 = scalar_lea.sflag [#allocation5], %s313
        %s315 = sand.u32 %s59, 1
        %s316 = smul.addr %s315, 16
        %s317 = scalar_lea.vmem [#allocation4], %s316
        %p318 = pneg %p72
        %p319 = pneg %p69
        %p320 = pneg %p93
        %p321 = pneg %p90
        %p322 = pneg %p114
        %p323 = pneg %p111
        %p324 = pneg %p140
        %p325 = pneg %p137
        %p326 = scmp.lt.s32.totalorder %s25, 1
        %s327 = scalar_select %p326, %s25, 1
        %s328 = smul.addr %s327, 4
        %s329 = scalar_lea.vmem %s4, %s328
        %p330 = pneg %p166
        %p331 = pneg %p163
        %p332 = scmp.lt.s32.totalorder %s25, 1
        %s333 = scalar_select %p332, %s25, 1
        %s334 = smul.addr %s333, 4
        %s335 = scalar_lea.vmem %s5, %s334
        %p336 = pneg %p192
        %p337 = pneg %p189
        %p338 = scmp.lt.s32.totalorder %s25, 1
        %s339 = scalar_select %p338, %s25, 1
        %s340 = smul.addr %s339, 4
        %s341 = scalar_lea.vmem %s6, %s340
        %p342 = pneg %p218
        %p343 = pneg %p215
        %p344 = scmp.lt.s32.totalorder %s25, 1
        %s345 = scalar_select %p344, %s25, 1
        %s346 = smul.addr %s345, 4
        %s347 = scalar_lea.vmem %s7, %s346
        %p348 = scmp.lt.s32.totalorder %s25, 1
        %s349 = scalar_select %p348, %s25, 1
        %s350 = smul.addr %s349, 4
        %s351 = scalar_lea.vmem %s4, %s350
        %p352 = scmp.lt.s32.totalorder %s25, 1
        %s353 = scalar_select %p352, %s25, 1
        %s354 = smul.addr %s353, 4
        %s355 = scalar_lea.vmem %s5, %s354
        %p356 = scmp.lt.s32.totalorder %s25, 1
        %s357 = scalar_select %p356, %s25, 1
        %s358 = smul.addr %s357, 4
        %s359 = scalar_lea.vmem %s6, %s358
        %p360 = scmp.lt.s32.totalorder %s25, 1
        %s361 = scalar_select %p360, %s25, 1
        %s362 = smul.addr %s361, 4
        %s363 = scalar_lea.vmem %s7, %s362
        %v364 = vld [vmem:[%s2] sm:$0xf]
        %v365 = vld [vmem:[%s292] sm:$0xff]
        %v366 = vld [vmem:[%s292 + $0x8] sm:$0xff]
        %vm367 = vcmask 64512
        %v369 = vsel %vm367, %v364, 0
        %371 = vmatprep.subr.mxu0 %v366
        %372 = vmatpush1.msra.mxu0 %v365
        %373 = vmatprep.subr.mxu0 0.0
        %374 = vmatpush1.msra.mxu0 0.0
        %375 = vmatprep.subr.mxu0 0.0
        %376 = vmatpush1.msra.mxu0 0.0
        %377 = vmatprep.subr.mxu0 0.0
        %378 = vmatpush1.msra.mxu0 0.0
        %379 = vmatprep.subr.mxu0 0.0
        %380 = vmatpush1.msra.mxu0 0.0
        %381 = vmatprep.subr.mxu0 0.0
        %382 = vmatpush1.msra.mxu0 0.0
        %383 = vmatprep.subr.mxu0 0.0
        %384 = vmatpush1.msra.mxu0 0.0
        %385 = vmatprep.subr.mxu0 0.0
        %386 = vmatpush1.msra.mxu0 0.0
        %387 = vmatprep.subr.mxu0 0.0
        %388 = vmatpush1.msra.mxu0 0.0
        %389 = vmatprep.subr.mxu0 0.0
        %390 = vmatpush1.msra.mxu0 0.0
        %391 = vmatprep.subr.mxu0 0.0
        %392 = vmatpush1.msra.mxu0 0.0
        %393 = vmatprep.subr.mxu0 0.0
        %394 = vmatpush1.msra.mxu0 0.0
        %395 = vmatprep.subr.mxu0 0.0
        %396 = vmatpush1.msra.mxu0 0.0
        %397 = vmatprep.subr.mxu0 0.0
        %398 = vmatpush1.msra.mxu0 0.0
        %399 = vmatprep.subr.mxu0 0.0
        %400 = vmatpush1.msra.mxu0 0.0
        %401 = vmatprep.subr.mxu0 0.0
        %402 = vmatpush1.msra.mxu0 0.0
        %403 = vmatprep.subr.mxu0 0.0
        %404 = vmatpush1.msra.mxu0 0.0
        %405 = vmatprep.subr.mxu0 0.0
        %406 = vmatpush1.msra.mxu0 0.0
        %407 = vmatprep.subr.mxu0 0.0
        %408 = vmatpush1.msra.mxu0 0.0
        %409 = vmatprep.subr.mxu0 0.0
        %410 = vmatpush1.msra.mxu0 0.0
        %411 = vmatprep.subr.mxu0 0.0
        %412 = vmatpush1.msra.mxu0 0.0
        %413 = vmatprep.subr.mxu0 0.0
        %414 = vmatpush1.msra.mxu0 0.0
        %415 = vmatprep.subr.mxu0 0.0
        %416 = vmatpush1.msra.mxu0 0.0
        %417 = vmatprep.subr.mxu0 0.0
        %418 = vmatpush1.msra.mxu0 0.0
        %419 = vmatprep.subr.mxu0 0.0
        %420 = vmatpush1.msra.mxu0 0.0
        %421 = vmatprep.subr.mxu0 0.0
        %422 = vmatpush1.msra.mxu0 0.0
        %423 = vmatprep.subr.mxu0 0.0
        %424 = vmatpush1.msra.mxu0 0.0
        %425 = vmatprep.subr.mxu0 0.0
        %426 = vmatpush1.msra.mxu0 0.0
        %427 = vmatprep.subr.mxu0 0.0
        %428 = vmatpush1.msra.mxu0 0.0
        %429 = vmatprep.subr.mxu0 0.0
        %430 = vmatpush1.msra.mxu0 0.0
        %431 = vmatprep.subr.mxu0 0.0
        %432 = vmatpush1.msra.mxu0 0.0
        %433 = vmatprep.subr.mxu0 0.0
        %434 = vmatpush1.msra.mxu0 0.0
        %435 = vmatprep.mubr.f32.mxu0 0.0
        %436 = vmatmul.mubr.f32.gmra.mrb[0].mxu0 %v369
        %v437 = vpop.f32.mrb[0].mxu0
        %v438 = vadd.f32 0.0, %v437
        %v439 = vpop.f32.mrb[0].mxu0
        %v440 = vadd.f32 0.0, %v439
        %441 = vdwg.mxu0
        %v442 = vld [vmem:[%s3] sm:$0xf]
        %v443 = vld [vmem:[%s301] sm:$0xff]
        %v444 = vld [vmem:[%s301 + $0x8] sm:$0xff]
        %v446 = vsel %vm367, %v442, 0
        %448 = vmatprep.subr.mxu0 %v444
        %449 = vmatpush1.msra.mxu0 %v443
        %450 = vmatprep.subr.mxu0 0.0
        %451 = vmatpush1.msra.mxu0 0.0
        %452 = vmatprep.subr.mxu0 0.0
        %453 = vmatpush1.msra.mxu0 0.0
        %454 = vmatprep.subr.mxu0 0.0
        %455 = vmatpush1.msra.mxu0 0.0
        %456 = vmatprep.subr.mxu0 0.0
        %457 = vmatpush1.msra.mxu0 0.0
        %458 = vmatprep.subr.mxu0 0.0
        %459 = vmatpush1.msra.mxu0 0.0
        %460 = vmatprep.subr.mxu0 0.0
        %461 = vmatpush1.msra.mxu0 0.0
        %462 = vmatprep.subr.mxu0 0.0
        %463 = vmatpush1.msra.mxu0 0.0
        %464 = vmatprep.subr.mxu0 0.0
        %465 = vmatpush1.msra.mxu0 0.0
        %466 = vmatprep.subr.mxu0 0.0
        %467 = vmatpush1.msra.mxu0 0.0
        %468 = vmatprep.subr.mxu0 0.0
        %469 = vmatpush1.msra.mxu0 0.0
        %470 = vmatprep.subr.mxu0 0.0
        %471 = vmatpush1.msra.mxu0 0.0
        %472 = vmatprep.subr.mxu0 0.0
        %473 = vmatpush1.msra.mxu0 0.0
        %474 = vmatprep.subr.mxu0 0.0
        %475 = vmatpush1.msra.mxu0 0.0
        %476 = vmatprep.subr.mxu0 0.0
        %477 = vmatpush1.msra.mxu0 0.0
        %478 = vmatprep.subr.mxu0 0.0
        %479 = vmatpush1.msra.mxu0 0.0
        %480 = vmatprep.subr.mxu0 0.0
        %481 = vmatpush1.msra.mxu0 0.0
        %482 = vmatprep.subr.mxu0 0.0
        %483 = vmatpush1.msra.mxu0 0.0
        %484 = vmatprep.subr.mxu0 0.0
        %485 = vmatpush1.msra.mxu0 0.0
        %486 = vmatprep.subr.mxu0 0.0
        %487 = vmatpush1.msra.mxu0 0.0
        %488 = vmatprep.subr.mxu0 0.0
        %489 = vmatpush1.msra.mxu0 0.0
        %490 = vmatprep.subr.mxu0 0.0
        %491 = vmatpush1.msra.mxu0 0.0
        %492 = vmatprep.subr.mxu0 0.0
        %493 = vmatpush1.msra.mxu0 0.0
        %494 = vmatprep.subr.mxu0 0.0
        %495 = vmatpush1.msra.mxu0 0.0
        %496 = vmatprep.subr.mxu0 0.0
        %497 = vmatpush1.msra.mxu0 0.0
        %498 = vmatprep.subr.mxu0 0.0
        %499 = vmatpush1.msra.mxu0 0.0
        %500 = vmatprep.subr.mxu0 0.0
        %501 = vmatpush1.msra.mxu0 0.0
        %502 = vmatprep.subr.mxu0 0.0
        %503 = vmatpush1.msra.mxu0 0.0
        %504 = vmatprep.subr.mxu0 0.0
        %505 = vmatpush1.msra.mxu0 0.0
        %506 = vmatprep.subr.mxu0 0.0
        %507 = vmatpush1.msra.mxu0 0.0
        %508 = vmatprep.subr.mxu0 0.0
        %509 = vmatpush1.msra.mxu0 0.0
        %510 = vmatprep.subr.mxu0 0.0
        %511 = vmatpush1.msra.mxu0 0.0
        %512 = vmatprep.mubr.f32.mxu0 0.0
        %513 = vmatmul.mubr.f32.gmra.mrb[0].mxu0 %v446
        %v514 = vpop.f32.mrb[0].mxu0
        %v515 = vadd.f32 0.0, %v514
        %v516 = vpop.f32.mrb[0].mxu0
        %v517 = vadd.f32 0.0, %v516
        %518 = vdwg.mxu0
        %vm519 = vcmask 1043456
        %v520 = vsel %vm519, %v438, 0.0
        %v521 = vsel %vm519, %v440, 0.0
        %v522 = vadd.f32 %v520, %v521
        %523 = vadd.xlane.f32.xlu0 %v522
        %v524 = vpop.xlane.xlu0 %523
        %vm525 = vcmask 3072
        %526 = vst.msk [vmem:[%s351] sm:$0xf] %vm525, %v524
        %v527 = vmul.f32 %v438, %v438
        %v528 = vmul.f32 %v440, %v440
        %v529 = vsel %vm519, %v527, 0.0
        %v530 = vsel %vm519, %v528, 0.0
        %v531 = vadd.f32 %v529, %v530
        %532 = vadd.xlane.f32.xlu0 %v531
        %v533 = vpop.xlane.xlu0 %532
        %534 = vst.msk [vmem:[%s355] sm:$0xf] %vm525, %v533
        %v535 = vsel %vm519, %v515, 0.0
        %v536 = vsel %vm519, %v517, 0.0
        %v537 = vadd.f32 %v535, %v536
        %538 = vadd.xlane.f32.xlu0 %v537
        %v539 = vpop.xlane.xlu0 %538
        %540 = vst.msk [vmem:[%s359] sm:$0xf] %vm525, %v539
        %v541 = vmul.f32 %v515, %v515
        %v542 = vmul.f32 %v517, %v517
        %v543 = vsel %vm519, %v541, 0.0
        %v544 = vsel %vm519, %v542, 0.0
        %v545 = vadd.f32 %v543, %v544
        %546 = vadd.xlane.f32.xlu0 %v545
        %v547 = vpop.xlane.xlu0 %546
        %548 = vst.msk [vmem:[%s363] sm:$0xf] %vm525, %v547
        %p549 = scmp.lt.s32.totalorder %s25, 1
        %s550 = scalar_select %p549, %s25, 1
        %s551 = smul.addr %s550, 4
        %s552 = scalar_lea.vmem %s4, %s551
        %p553 = scmp.lt.s32.totalorder %s25, 1
        %s554 = scalar_select %p553, %s25, 1
        %s555 = smul.addr %s554, 4
        %s556 = scalar_lea.vmem %s5, %s555
        %p557 = scmp.lt.s32.totalorder %s25, 1
        %s558 = scalar_select %p557, %s25, 1
        %s559 = smul.addr %s558, 4
        %s560 = scalar_lea.vmem %s6, %s559
        %p561 = scmp.lt.s32.totalorder %s25, 1
        %s562 = scalar_select %p561, %s25, 1
        %s563 = smul.addr %s562, 4
        %s564 = scalar_lea.vmem %s7, %s563
        // Predicated region
        $region45: #{tpu_custom_call.1} parent=35 // pred_check
          %p565 = pneg %p137
        $region46: #{tpu_custom_call.1} parent=35 // pred_check_branch
          %567 = sbr.rel (%p565) target = $region48
        $region47: #{tpu_custom_call.1} parent=35 // pred_region
          _
        $region48: #{tpu_custom_call.1} parent=35 // pred_fallthru
          _
        // Predicated region
        $region49: #{tpu_custom_call.1} parent=35 // pred_check
          %p568 = pneg %p163
        $region50: #{tpu_custom_call.1} parent=35 // pred_check_branch
          %570 = sbr.rel (%p568) target = $region52
        $region51: #{tpu_custom_call.1} parent=35 // pred_region
          _
        $region52: #{tpu_custom_call.1} parent=35 // pred_fallthru
          _
        // Predicated region
        $region53: #{tpu_custom_call.1} parent=35 // pred_check
          %p571 = pneg %p189
        $region54: #{tpu_custom_call.1} parent=35 // pred_check_branch
          %573 = sbr.rel (%p571) target = $region56
        $region55: #{tpu_custom_call.1} parent=35 // pred_region
          _
        $region56: #{tpu_custom_call.1} parent=35 // pred_fallthru
          _
        // Predicated region
        $region57: #{tpu_custom_call.1} parent=35 // pred_check
          %p574 = pneg %p215
        $region58: #{tpu_custom_call.1} parent=35 // pred_check_branch
          %576 = sbr.rel (%p574) target = $region60
        $region59: #{tpu_custom_call.1} parent=35 // pred_region
          _
        $region60: #{tpu_custom_call.1} parent=35 // pred_fallthru
          _
      $region36: #{tpu_custom_call.1} parent=5 // pred_fallthru
        _
      %p577 = scmp.le.s32.totalorder 2, %s20
      // Predicated region
      $region61: #{tpu_custom_call.1} parent=5 // pred_check
        %p578 = pneg %p577
      $region62: #{tpu_custom_call.1} parent=5 // pred_check_branch
        %580 = sbr.rel (%p578) target = $region64
      $region63: #{tpu_custom_call.1} parent=5 // pred_region
        %s581 = ssub.s32 %s20, 2
        // Predicated region
        $region65: #{tpu_custom_call.1} parent=63 // pred_check
          %p582 = pneg %p143
        $region66: #{tpu_custom_call.1} parent=63 // pred_check_branch
          %584 = sbr.rel (%p582) target = $region68
        $region67: #{tpu_custom_call.1} parent=63 // pred_region
          %p585 = scmp.lt.s32.totalorder %s26, 1
          %s586 = scalar_select %p585, %s26, 1
          %s587 = smul.addr %s586, 4
          %s588 = scalar_lea.vmem %s4, %s587
        $region68: #{tpu_custom_call.1} parent=63 // pred_fallthru
          _
        // Predicated region
        $region69: #{tpu_custom_call.1} parent=63 // pred_check
          %p589 = pneg %p169
        $region70: #{tpu_custom_call.1} parent=63 // pred_check_branch
          %591 = sbr.rel (%p589) target = $region72
        $region71: #{tpu_custom_call.1} parent=63 // pred_region
          %p592 = scmp.lt.s32.totalorder %s26, 1
          %s593 = scalar_select %p592, %s26, 1
          %s594 = smul.addr %s593, 4
          %s595 = scalar_lea.vmem %s5, %s594
        $region72: #{tpu_custom_call.1} parent=63 // pred_fallthru
          _
        // Predicated region
        $region73: #{tpu_custom_call.1} parent=63 // pred_check
          %p596 = pneg %p195
        $region74: #{tpu_custom_call.1} parent=63 // pred_check_branch
          %598 = sbr.rel (%p596) target = $region76
        $region75: #{tpu_custom_call.1} parent=63 // pred_region
          %p599 = scmp.lt.s32.totalorder %s26, 1
          %s600 = scalar_select %p599, %s26, 1
          %s601 = smul.addr %s600, 4
          %s602 = scalar_lea.vmem %s6, %s601
        $region76: #{tpu_custom_call.1} parent=63 // pred_fallthru
          _
        // Predicated region
        $region77: #{tpu_custom_call.1} parent=63 // pred_check
          %p603 = pneg %p221
        $region78: #{tpu_custom_call.1} parent=63 // pred_check_branch
          %605 = sbr.rel (%p603) target = $region80
        $region79: #{tpu_custom_call.1} parent=63 // pred_region
          %p606 = scmp.lt.s32.totalorder %s26, 1
          %s607 = scalar_select %p606, %s26, 1
          %s608 = smul.addr %s607, 4
          %s609 = scalar_lea.vmem %s7, %s608
        $region80: #{tpu_custom_call.1} parent=63 // pred_fallthru
          _
      $region64: #{tpu_custom_call.1} parent=5 // pred_fallthru
        _
    $region6: #{tpu_custom_call.1} parent=1 // loop_footer
      %s24 = sadd.s32 1, %s20
    $region7: #{tpu_custom_call.1} parent=1 // loop_footer_branch
      %19 = sbr.rel target = $region3
    $region8: #{tpu_custom_call.1} parent=1 // loop_exit
      _
    %610 = vsyncpa [#allocation3], 1
    %s611 = scalar_lea.sflag [#allocation3], 1
    %612 = vsyncpa %s611, 1
    %613 = vsyncpa [#allocation5], 1
    %s614 = scalar_lea.sflag [#allocation5], 1
    %615 = vsyncpa %s614, 1

</llo_original>
